<compile_context>
chip_gen: v5e
topology: v5e:2x2
jax: 0.10.0
libtpu: 0.0.40
codegen_flags: <defaults>
</compile_context>

<pallas_src>
from functools import partial

import numpy as np
import jax
import jax.numpy as jnp
from jax import lax
from jax.experimental import pallas as pl
from jax.experimental.pallas import tpu as pltpu


def _ac_layer_kernel(x_ref, bins_ref, inv_ref, wt_ref, b_ref, o_ref, acc_ref):
    # x_ref   : (B, TILE_L)    bf16   one L-tile of the flattened input
    # bins_ref: (2, C_PAD)     int32  row 0 = bin start, row 1 = bin end (global L index)
    # inv_ref : (1, C_PAD)     f32    1 / bin_length (0 on pad lanes)
    # wt_ref  : (C_PAD, C_PAD) f32    pre-transposed, zero-padded fc weight (W.T)
    # b_ref   : (1, C_PAD)     f32    zero-padded fc bias
    # o_ref   : (B, C_PAD)     f32    output (sliced to num_class outside)
    # acc_ref : (B, C_PAD)     f32    pooled accumulator (VMEM scratch)
    k = pl.program_id(0)
    tile_l = x_ref.shape[1]
    c_pad = wt_ref.shape[1]

    @pl.when(k == 0)
    def _():
        acc_ref[...] = jnp.zeros_like(acc_ref)

    # Regenerate this tile's slice of the adaptive-avg-pool matrix in VMEM
    # (VPU iota + compare + select; zero HBM traffic for the pool weights).
    l_idx = lax.broadcasted_iota(jnp.int32, (tile_l, c_pad), 0) + k * tile_l
    start = bins_ref[0:1, :]
    end = bins_ref[1:2, :]
    p_tile = jnp.where((l_idx >= start) & (l_idx < end), inv_ref[...], 0.0)

    acc_ref[...] += jnp.dot(x_ref[...].astype(jnp.float32), p_tile,
                            preferred_element_type=jnp.float32)

    @pl.when(k == pl.num_programs(0) - 1)
    def _():
        out = jnp.dot(acc_ref[...], wt_ref[...], preferred_element_type=jnp.float32)
        o_ref[...] = out + b_ref[...]


def _adaptive_pool_bins(L, num_class):
    """Exact F.adaptive_avg_pool1d bin boundaries (integer math)."""
    i = np.arange(num_class, dtype=np.int64)
    starts = (i * L) // num_class
    ends = ((i + 1) * L + num_class - 1) // num_class  # ceil((i+1)*L/C)
    return starts, ends


def _round_up(x, m):
    return ((x + m - 1) // m) * m


@partial(jax.jit, static_argnames=("num_class", "tile_l"))
def ac_layer_forward(x_nchw, weight, bias, num_class, tile_l=512):
    b = x_nchw.shape[0]
    L = int(np.prod(x_nchw.shape[1:]))
    c_pad = _round_up(num_class, 128)
    n_tiles = pl.cdiv(L, tile_l)
    L_pad = n_tiles * tile_l

    # view(b, 1, -1) -> (b, L); stream as bf16 (f32 accumulation in-kernel).
    x_flat = x_nchw.reshape(b, L).astype(jnp.bfloat16)
    if L_pad != L:
        # Padded positions are >= every bin end, so they never contribute.
        x_flat = jnp.pad(x_flat, ((0, 0), (0, L_pad - L)))

    # Bin tables — static-shape numpy, baked as constants under jit.
    starts, ends = _adaptive_pool_bins(L, num_class)
    bins_np = np.zeros((2, c_pad), np.int32)
    bins_np[0, :num_class] = starts
    bins_np[1, :num_class] = ends          # pad lanes: start == end == 0 -> never selected
    inv_np = np.zeros((1, c_pad), np.float32)
    inv_np[0, :num_class] = 1.0 / (ends - starts)
    bins = jnp.asarray(bins_np)
    inv = jnp.asarray(inv_np)

    # Lane-pad the FC to 128 and pre-transpose the weight (layout plumbing).
    wt_pad = jnp.zeros((c_pad, c_pad), jnp.float32)
    wt_pad = wt_pad.at[:num_class, :num_class].set(weight.astype(jnp.float32).T)
    bias_pad = jnp.zeros((1, c_pad), jnp.float32)
    bias_pad = bias_pad.at[0, :num_class].set(bias.astype(jnp.float32))

    cost = pl.CostEstimate(
        flops=2 * b * L_pad * c_pad + 2 * b * c_pad * c_pad,
        transcendentals=0,
        bytes_accessed=(x_flat.size * 2 + bins.size * 4 + inv.size * 4
                        + wt_pad.size * 4 + bias_pad.size * 4 + b * c_pad * 4),
    )

    out_pad = pl.pallas_call(
        _ac_layer_kernel,
        out_shape=jax.ShapeDtypeStruct((b, c_pad), jnp.float32),
        grid_spec=pltpu.PrefetchScalarGridSpec(
            num_scalar_prefetch=0,
            grid=(n_tiles,),
            in_specs=[
                pl.BlockSpec((b, tile_l), lambda k: (0, k)),      # stream x over L
                pl.BlockSpec((2, c_pad), lambda k: (0, 0)),       # bin starts/ends (resident)
                pl.BlockSpec((1, c_pad), lambda k: (0, 0)),       # 1/len           (resident)
                pl.BlockSpec((c_pad, c_pad), lambda k: (0, 0)),   # fc weight^T     (resident)
                pl.BlockSpec((1, c_pad), lambda k: (0, 0)),       # fc bias         (resident)
            ],
            out_specs=pl.BlockSpec((b, c_pad), lambda k: (0, 0)),
            scratch_shapes=[pltpu.VMEM((b, c_pad), jnp.float32)],
        ),
        compiler_params=pltpu.CompilerParams(
            # Single L axis is a reduction -> "arbitrary". For large real
            # workloads, add an independent (batch / L-split) "parallel" axis
            # to shard across v7x's two TensorCores.
            dimension_semantics=("arbitrary",),
            vmem_limit_bytes=32 * 1024 * 1024,
        ),
        cost_estimate=cost,
    )(x_flat, bins, inv, wt_pad, bias_pad)

    # NOTE: PyTorch's .squeeze() would also drop the batch dim when b == 1;
    # we keep (b, num_class) and use b > 1 in the demo.
    return out_pad[:, :num_class]


def reference_forward(x_nchw, weight, bias, num_class):
    """float64 numpy reference (with the same bf16 input rounding the kernel uses)."""
    b = x_nchw.shape[0]
    L = int(np.prod(x_nchw.shape[1:]))
    x_bf = np.asarray(x_nchw.astype(jnp.bfloat16).astype(jnp.float32),
                      dtype=np.float64).reshape(b, L)
    starts, ends = _adaptive_pool_bins(L, num_class)
    pooled = np.stack([x_bf[:, s:e].mean(axis=1) for s, e in zip(starts, ends)], axis=1)
    w64 = np.asarray(weight, dtype=np.float64)
    b64 = np.asarray(bias, dtype=np.float64)
    return pooled @ w64.T + b64[None, :]


if __name__ == "__main__":
    num_class = 10
    b, n_c, w, h = 2, 4, 16, 16

    key = jax.random.PRNGKey(0)
    kx, kw, kb = jax.random.split(key, 3)

    x = jax.random.normal(kx, (b, n_c, w, h), dtype=jnp.float32)

    # Deterministic nn.Linear-style init: U(-1/sqrt(in), 1/sqrt(in))
    bound = 1.0 / np.sqrt(num_class)
    weight = jax.random.uniform(kw, (num_class, num_class), jnp.float32, -bound, bound)
    bias = jax.random.uniform(kb, (num_class,), jnp.float32, -bound, bound)

    out = ac_layer_forward(x, weight, bias, num_class=num_class)
    out = jax.block_until_ready(out)

    ref = reference_forward(x, weight, bias, num_class)
    assert out.shape == (b, num_class)
    assert np.allclose(np.asarray(out, dtype=np.float64), ref, atol=5e-4, rtol=5e-4)

    print("KERNEL_OK")
</pallas_src>

<mosaic_0001>
module attributes {stable_mosaic.version = 11 : i64} {
  func.func @_ac_layer_kernel(%arg0: i32, %arg1: memref<2x512xbf16, #tpu.memory_space<vmem>>, %arg2: memref<2x128xi32, #tpu.memory_space<vmem>>, %arg3: memref<1x128xf32, #tpu.memory_space<vmem>>, %arg4: memref<128x128xf32, #tpu.memory_space<vmem>>, %arg5: memref<1x128xf32, #tpu.memory_space<vmem>>, %arg6: memref<2x128xf32, #tpu.memory_space<vmem>>, %arg7: memref<2x128xf32, #tpu.memory_space<vmem>>) attributes {dimension_semantics = [#tpu.dimension_semantics<arbitrary>], iteration_bounds = array<i64: 2>, scalar_prefetch = 0 : i64, scratch_operands = 1 : i64, tpu.core_type = #tpu.core_type<tc>, window_params = [{transform_indices = @transform_0, window_bounds = array<i64: 2, 512>}, {pipeline_mode = #tpu.pipeline_mode<synchronous>, transform_indices = @transform_1, window_bounds = array<i64: 2, 128>}, {pipeline_mode = #tpu.pipeline_mode<synchronous>, transform_indices = @transform_2, window_bounds = array<i64: 1, 128>}, {pipeline_mode = #tpu.pipeline_mode<synchronous>, transform_indices = @transform_3, window_bounds = array<i64: 128, 128>}, {pipeline_mode = #tpu.pipeline_mode<synchronous>, transform_indices = @transform_4, window_bounds = array<i64: 1, 128>}, {pipeline_mode = #tpu.pipeline_mode<synchronous>, transform_indices = @transform_5, window_bounds = array<i64: 2, 128>}]} {
    %c0_i32 = arith.constant 0 : i32
    %0 = arith.cmpi eq, %arg0, %c0_i32 : i32
    %1 = arith.extui %0 : i1 to i32
    %c0_i32_0 = arith.constant 0 : i32
    %2 = arith.cmpi ne, %1, %c0_i32_0 : i32
    scf.if %2 {
      %cst_13 = arith.constant 0.000000e+00 : f32
      %28 = vector.broadcast %cst_13 : f32 to vector<2x128xf32>
      %c0_14 = arith.constant 0 : index
      %c0_15 = arith.constant 0 : index
      %29 = vector.load %arg7[%c0_14, %c0_15] : memref<2x128xf32, #tpu.memory_space<vmem>>, vector<2x128xf32>
      tpu.vector_store %arg7[%c0_14, %c0_15], %28 {strides = array<i32>} : memref<2x128xf32, #tpu.memory_space<vmem>>, vector<2x128xf32>,
    } else {
    }
    %3 = tpu.iota {dimensions = array<i32: 0>} : vector<512x128xi32>
    %c512_i32 = arith.constant 512 : i32
    %4 = arith.muli %arg0, %c512_i32 : i32
    %5 = vector.broadcast %4 : i32 to vector<512x128xi32>
    %6 = arith.addi %3, %5 : vector<512x128xi32>
    %c0 = arith.constant 0 : index
    %c0_1 = arith.constant 0 : index
    %7 = vector.load %arg2[%c0, %c0_1] : memref<2x128xi32, #tpu.memory_space<vmem>>, vector<1x128xi32>
    %c1 = arith.constant 1 : index
    %c0_2 = arith.constant 0 : index
    %8 = vector.load %arg2[%c1, %c0_2] : memref<2x128xi32, #tpu.memory_space<vmem>>, vector<1x128xi32>
    %9 = vector.broadcast %7 : vector<1x128xi32> to vector<512x128xi32>
    %10 = arith.cmpi sge, %6, %9 : vector<512x128xi32>
    %11 = vector.broadcast %8 : vector<1x128xi32> to vector<512x128xi32>
    %12 = arith.cmpi slt, %6, %11 : vector<512x128xi32>
    %13 = arith.andi %10, %12 : vector<512x128xi1>
    %c0_3 = arith.constant 0 : index
    %c0_4 = arith.constant 0 : index
    %14 = vector.load %arg3[%c0_3, %c0_4] : memref<1x128xf32, #tpu.memory_space<vmem>>, vector<1x128xf32>
    %cst = arith.constant 0.000000e+00 : f32
    %15 = vector.shape_cast %14 : vector<1x128xf32> to vector<1x128xf32>
    %16 = vector.broadcast %15 : vector<1x128xf32> to vector<512x128xf32>
    %17 = vector.broadcast %cst : f32 to vector<512x128xf32>
    %18 = arith.select %13, %16, %17 : vector<512x128xi1>, vector<512x128xf32>
    %c0_5 = arith.constant 0 : index
    %c0_6 = arith.constant 0 : index
    %19 = vector.load %arg7[%c0_5, %c0_6] : memref<2x128xf32, #tpu.memory_space<vmem>>, vector<2x128xf32>
    %c0_7 = arith.constant 0 : index
    %c0_8 = arith.constant 0 : index
    %20 = vector.load %arg1[%c0_7, %c0_8] : memref<2x512xbf16, #tpu.memory_space<vmem>>, vector<2x512xbf16>
    %21 = arith.extf %20 : vector<2x512xbf16> to vector<2x512xf32>
    %cst_9 = arith.constant dense<0.000000e+00> : vector<2x128xf32>
    %22 = tpu.matmul %21, %18, %cst_9 {dimension_numbers = #tpu.dot_dimension_numbers<[1], [0], [0], [1], [0, 0, 1, 1], [], []>} : vector<2x512xf32>, vector<512x128xf32>, vector<2x128xf32> -> vector<2x128xf32>
    %23 = arith.addf %19, %22 : vector<2x128xf32>
    %c0_10 = arith.constant 0 : index
    %c0_11 = arith.constant 0 : index
    %24 = vector.load %arg7[%c0_10, %c0_11] : memref<2x128xf32, #tpu.memory_space<vmem>>, vector<2x128xf32>
    tpu.vector_store %arg7[%c0_10, %c0_11], %23 {strides = array<i32>} : memref<2x128xf32, #tpu.memory_space<vmem>>, vector<2x128xf32>,
    %c1_i32 = arith.constant 1 : i32
    %25 = arith.cmpi eq, %arg0, %c1_i32 : i32
    %26 = arith.extui %25 : i1 to i32
    %c0_i32_12 = arith.constant 0 : i32
    %27 = arith.cmpi ne, %26, %c0_i32_12 : i32
    scf.if %27 {
      %c0_13 = arith.constant 0 : index
      %c0_14 = arith.constant 0 : index
      %28 = vector.load %arg7[%c0_13, %c0_14] : memref<2x128xf32, #tpu.memory_space<vmem>>, vector<2x128xf32>
      %c0_15 = arith.constant 0 : index
      %c0_16 = arith.constant 0 : index
      %29 = vector.load %arg4[%c0_15, %c0_16] : memref<128x128xf32, #tpu.memory_space<vmem>>, vector<128x128xf32>
      %cst_17 = arith.constant dense<0.000000e+00> : vector<2x128xf32>
      %30 = tpu.matmul %28, %29, %cst_17 {dimension_numbers = #tpu.dot_dimension_numbers<[1], [0], [0], [1], [0, 0, 1, 1], [], []>} : vector<2x128xf32>, vector<128x128xf32>, vector<2x128xf32> -> vector<2x128xf32>
      %c0_18 = arith.constant 0 : index
      %c0_19 = arith.constant 0 : index
      %31 = vector.load %arg5[%c0_18, %c0_19] : memref<1x128xf32, #tpu.memory_space<vmem>>, vector<1x128xf32>
      %32 = vector.broadcast %31 : vector<1x128xf32> to vector<2x128xf32>
      %33 = arith.addf %30, %32 : vector<2x128xf32>
      %c0_20 = arith.constant 0 : index
      %c0_21 = arith.constant 0 : index
      %34 = vector.load %arg6[%c0_20, %c0_21] : memref<2x128xf32, #tpu.memory_space<vmem>>, vector<2x128xf32>
      tpu.vector_store %arg6[%c0_20, %c0_21], %33 {strides = array<i32>} : memref<2x128xf32, #tpu.memory_space<vmem>>, vector<2x128xf32>,
    } else {
    }
    return
  }
  func.func @transform_0(%arg0: i32) -> (i32, i32) {
    %c0_i32 = arith.constant 0 : i32
    %c0_i32_0 = arith.constant 0 : i32
    return %c0_i32, %arg0 : i32, i32
  }
  func.func @transform_1(%arg0: i32) -> (i32, i32) {
    %c0_i32 = arith.constant 0 : i32
    %c0_i32_0 = arith.constant 0 : i32
    %c0_i32_1 = arith.constant 0 : i32
    return %c0_i32, %c0_i32_0 : i32, i32
  }
  func.func @transform_2(%arg0: i32) -> (i32, i32) {
    %c0_i32 = arith.constant 0 : i32
    %c0_i32_0 = arith.constant 0 : i32
    %c0_i32_1 = arith.constant 0 : i32
    return %c0_i32, %c0_i32_0 : i32, i32
  }
  func.func @transform_3(%arg0: i32) -> (i32, i32) {
    %c0_i32 = arith.constant 0 : i32
    %c0_i32_0 = arith.constant 0 : i32
    %c0_i32_1 = arith.constant 0 : i32
    return %c0_i32, %c0_i32_0 : i32, i32
  }
  func.func @transform_4(%arg0: i32) -> (i32, i32) {
    %c0_i32 = arith.constant 0 : i32
    %c0_i32_0 = arith.constant 0 : i32
    %c0_i32_1 = arith.constant 0 : i32
    return %c0_i32, %c0_i32_0 : i32, i32
  }
  func.func @transform_5(%arg0: i32) -> (i32, i32) {
    %c0_i32 = arith.constant 0 : i32
    %c0_i32_0 = arith.constant 0 : i32
    %c0_i32_1 = arith.constant 0 : i32
    return %c0_i32, %c0_i32_0 : i32, i32
  }
}

</mosaic_0001>

<llo_original>
// kernel: ac_layer_forward.1
$region0: #{ac_layer_forward.1}
  #allocation0 [shape = 'u32[]', space=smem, size = 0x4, offset = 0x4, fixed_abs, tag = 'smem constant byte address 0x4 - core index']
  #allocation1 [shape = 'u32[72,128]{1,0:T(1,128)}', space=vmem, size = 0x9000, scoped, tag = 'internal scratch']
  #allocation2 [shape = 'f32[2,128]{1,0:T(2,128)}', space=vmem, size = 0x400, scoped, tag = 'scratch operand']
  %s0 = inlined_call_operand.vmem [shape: bf16[2,1024], index: 0, kind: input, shape index: {}]
  %s1 = inlined_call_operand.vmem [shape: s32[2,128], index: 1, kind: input, shape index: {}]
  %s2 = inlined_call_operand.vmem [shape: f32[1,128], index: 2, kind: input, shape index: {}]
  %s3 = inlined_call_operand.vmem [shape: f32[128,128], index: 3, kind: input, shape index: {}]
  %s4 = inlined_call_operand.vmem [shape: f32[1,128], index: 4, kind: input, shape index: {}]
  %s5 = inlined_call_operand.hbm [shape: f32[2,128], index: 5, kind: output, shape index: {}]
  %s6 = sld [smem:[#allocation0]]
  $region61: #{ac_layer_forward.1} parent=0
    _
  %s8 = ssub.s32 1, %s6
  %s9 = scalar_select 0, %s8, %s6
  $region1: #{ac_layer_forward.1} parent=0
    #allocation3 [shape = 'u8[1024]{0}', space=vmem, size = 0x400, scoped, tag = 'output window, operand 0, single buffered']
    #allocation4 [shape = 's32[2]{0}', space=sflag, size = 0x8, scoped, tag = 'scoped memory for ac_layer_forward.1']
    %10 = vsyncpa [#allocation4], 0
    loop: start=0, step=1, limit=4
    $region2: #{ac_layer_forward.1} parent=1 // loop_pre_header
      _
    $region3: #{ac_layer_forward.1} parent=1 // loop_header
      %s12 = sphi 0, %s16
      %p13 = scmp.ge.s32.totalorder %s12, 4
      %s22 = sphi 0, %s24
      %s25 = sphi 0, %s22
      %s26 = sphi 0, %s25
      %s42 = sphi 0, %s26
      %s46 = sphi 0, %s46
      %s48 = sphi 0, %s46
      %s49 = sphi 0, %s48
      %s63 = sphi 0, %s49
      %s67 = sphi 0, %s67
      %s69 = sphi 0, %s67
      %s70 = sphi 0, %s69
      %s84 = sphi 0, %s70
      %s88 = sphi 0, %s88
      %s90 = sphi 0, %s88
      %s91 = sphi 0, %s90
      %s105 = sphi 0, %s91
      %s109 = sphi 0, %s109
      %s111 = sphi 0, %s109
      %s112 = sphi 0, %s111
      %s126 = sphi 0, %s112
      %s130 = sphi 0, %s130
      %s132 = sphi 0, %s130
      %s133 = sphi 0, %s132
      %s147 = sphi 0, %s133
    $region4: #{ac_layer_forward.1} parent=1 // loop_header_branch
      %15 = sbr.rel (%p13) target = $region8
    $region5: #{ac_layer_forward.1} parent=1 // loop_body
      %s17 = ssub.s32 %s12, 1
      %s18 = ssub.s32 %s12, 2
      %s19 = sadd.s32 %s12, 1
      %s20 = ssub.s32 %s12, %s19
      %p21 = scmp.eq.s32.totalorder %s20, 0
      %s23 = sadd.s32 %s22, 1
      %s24 = scalar_select %p21, %s22, %s23
      %p27 = pneg %p21
      %p28 = scmp.eq.s32.totalorder %s12, 1
      %p29 = por %p27, %p28
      %p30 = scmp.ne.s32.totalorder %s22, %s25
      %p31 = scmp.eq.s32.totalorder %s12, 0
      %p32 = por %p30, %p31
      %p33 = scmp.ne.s32.totalorder %s22, %s25
      %p34 = scmp.eq.s32.totalorder %s17, 1
      %p35 = por %p33, %p34
      %p36 = scmp.ne.s32.totalorder %s25, %s26
      %p37 = scmp.eq.s32.totalorder %s17, 0
      %p38 = por %p36, %p37
      %p39 = scmp.ne.s32.totalorder %s25, %s26
      %p40 = scmp.eq.s32.totalorder %s18, 1
      %p41 = por %p39, %p40
      %p43 = scmp.ne.s32.totalorder %s26, %s42
      %p44 = scmp.eq.s32.totalorder %s18, 0
      %p45 = por %p43, %p44
      %s47 = sadd.s32 %s46, 1
      %p50 = scmp.eq.s32.totalorder %s12, 1
      %p51 = scmp.ne.s32.totalorder %s46, %s48
      %p52 = scmp.eq.s32.totalorder %s12, 0
      %p53 = por %p51, %p52
      %p54 = scmp.ne.s32.totalorder %s46, %s48
      %p55 = scmp.eq.s32.totalorder %s17, 1
      %p56 = por %p54, %p55
      %p57 = scmp.ne.s32.totalorder %s48, %s49
      %p58 = scmp.eq.s32.totalorder %s17, 0
      %p59 = por %p57, %p58
      %p60 = scmp.ne.s32.totalorder %s48, %s49
      %p61 = scmp.eq.s32.totalorder %s18, 1
      %p62 = por %p60, %p61
      %p64 = scmp.ne.s32.totalorder %s49, %s63
      %p65 = scmp.eq.s32.totalorder %s18, 0
      %p66 = por %p64, %p65
      %s68 = sadd.s32 %s67, 1
      %p71 = scmp.eq.s32.totalorder %s12, 1
      %p72 = scmp.ne.s32.totalorder %s67, %s69
      %p73 = scmp.eq.s32.totalorder %s12, 0
      %p74 = por %p72, %p73
      %p75 = scmp.ne.s32.totalorder %s67, %s69
      %p76 = scmp.eq.s32.totalorder %s17, 1
      %p77 = por %p75, %p76
      %p78 = scmp.ne.s32.totalorder %s69, %s70
      %p79 = scmp.eq.s32.totalorder %s17, 0
      %p80 = por %p78, %p79
      %p81 = scmp.ne.s32.totalorder %s69, %s70
      %p82 = scmp.eq.s32.totalorder %s18, 1
      %p83 = por %p81, %p82
      %p85 = scmp.ne.s32.totalorder %s70, %s84
      %p86 = scmp.eq.s32.totalorder %s18, 0
      %p87 = por %p85, %p86
      %s89 = sadd.s32 %s88, 1
      %p92 = scmp.eq.s32.totalorder %s12, 1
      %p93 = scmp.ne.s32.totalorder %s88, %s90
      %p94 = scmp.eq.s32.totalorder %s12, 0
      %p95 = por %p93, %p94
      %p96 = scmp.ne.s32.totalorder %s88, %s90
      %p97 = scmp.eq.s32.totalorder %s17, 1
      %p98 = por %p96, %p97
      %p99 = scmp.ne.s32.totalorder %s90, %s91
      %p100 = scmp.eq.s32.totalorder %s17, 0
      %p101 = por %p99, %p100
      %p102 = scmp.ne.s32.totalorder %s90, %s91
      %p103 = scmp.eq.s32.totalorder %s18, 1
      %p104 = por %p102, %p103
      %p106 = scmp.ne.s32.totalorder %s91, %s105
      %p107 = scmp.eq.s32.totalorder %s18, 0
      %p108 = por %p106, %p107
      %s110 = sadd.s32 %s109, 1
      %p113 = scmp.eq.s32.totalorder %s12, 1
      %p114 = scmp.ne.s32.totalorder %s109, %s111
      %p115 = scmp.eq.s32.totalorder %s12, 0
      %p116 = por %p114, %p115
      %p117 = scmp.ne.s32.totalorder %s109, %s111
      %p118 = scmp.eq.s32.totalorder %s17, 1
      %p119 = por %p117, %p118
      %p120 = scmp.ne.s32.totalorder %s111, %s112
      %p121 = scmp.eq.s32.totalorder %s17, 0
      %p122 = por %p120, %p121
      %p123 = scmp.ne.s32.totalorder %s111, %s112
      %p124 = scmp.eq.s32.totalorder %s18, 1
      %p125 = por %p123, %p124
      %p127 = scmp.ne.s32.totalorder %s112, %s126
      %p128 = scmp.eq.s32.totalorder %s18, 0
      %p129 = por %p127, %p128
      %s131 = sadd.s32 %s130, 1
      %p134 = scmp.eq.s32.totalorder %s12, 1
      %p135 = scmp.ne.s32.totalorder %s130, %s132
      %p136 = scmp.eq.s32.totalorder %s12, 0
      %p137 = por %p135, %p136
      %p138 = scmp.ne.s32.totalorder %s130, %s132
      %p139 = scmp.eq.s32.totalorder %s17, 1
      %p140 = por %p138, %p139
      %p141 = scmp.ne.s32.totalorder %s132, %s133
      %p142 = scmp.eq.s32.totalorder %s17, 0
      %p143 = por %p141, %p142
      %p144 = scmp.ne.s32.totalorder %s132, %s133
      %p145 = scmp.eq.s32.totalorder %s18, 1
      %p146 = por %p144, %p145
      %p148 = scmp.ne.s32.totalorder %s133, %s147
      %p149 = scmp.eq.s32.totalorder %s18, 0
      %p150 = por %p148, %p149
      %p151 = scmp.le.s32.totalorder 1, %s12
      %p152 = scmp.lt.s32.totalorder %s12, 3
      %p153 = pnand %p151, %p152
      %p154 = pneg %p153
      // Predicated region
      $region9: #{ac_layer_forward.1} parent=5 // pred_check
        _
      $region10: #{ac_layer_forward.1} parent=5 // pred_check_branch
        %156 = sbr.rel (%p153) target = $region12
      $region11: #{ac_layer_forward.1} parent=5 // pred_region
        %s157 = ssub.s32 %s12, 1
        // Predicated region
        $region13: #{ac_layer_forward.1} parent=11 // pred_check
          %p158 = pneg %p59
        $region14: #{ac_layer_forward.1} parent=11 // pred_check_branch
          %160 = sbr.rel (%p158) target = $region16
        $region15: #{ac_layer_forward.1} parent=11 // pred_region
          _
        $region16: #{ac_layer_forward.1} parent=11 // pred_fallthru
          _
        // Predicated region
        $region17: #{ac_layer_forward.1} parent=11 // pred_check
          %p161 = pneg %p80
        $region18: #{ac_layer_forward.1} parent=11 // pred_check_branch
          %163 = sbr.rel (%p161) target = $region20
        $region19: #{ac_layer_forward.1} parent=11 // pred_region
          _
        $region20: #{ac_layer_forward.1} parent=11 // pred_fallthru
          _
        // Predicated region
        $region21: #{ac_layer_forward.1} parent=11 // pred_check
          %p164 = pneg %p101
        $region22: #{ac_layer_forward.1} parent=11 // pred_check_branch
          %166 = sbr.rel (%p164) target = $region24
        $region23: #{ac_layer_forward.1} parent=11 // pred_region
          _
        $region24: #{ac_layer_forward.1} parent=11 // pred_fallthru
          _
        // Predicated region
        $region25: #{ac_layer_forward.1} parent=11 // pred_check
          %p167 = pneg %p122
        $region26: #{ac_layer_forward.1} parent=11 // pred_check_branch
          %169 = sbr.rel (%p167) target = $region28
        $region27: #{ac_layer_forward.1} parent=11 // pred_region
          _
        $region28: #{ac_layer_forward.1} parent=11 // pred_fallthru
          _
      $region12: #{ac_layer_forward.1} parent=5 // pred_fallthru
        _
      %p170 = scmp.lt.s32.totalorder %s12, 2
      // Predicated region
      $region29: #{ac_layer_forward.1} parent=5 // pred_check
        %p171 = pneg %p170
      $region30: #{ac_layer_forward.1} parent=5 // pred_check_branch
        %173 = sbr.rel (%p171) target = $region32
      $region31: #{ac_layer_forward.1} parent=5 // pred_region
        // Predicated region
        $region33: #{ac_layer_forward.1} parent=31 // pred_check
          %p174 = pneg %p32
        $region34: #{ac_layer_forward.1} parent=31 // pred_check_branch
          %176 = sbr.rel (%p174) target = $region36
        $region35: #{ac_layer_forward.1} parent=31 // pred_region
          %s177 = smul.u32 4, %s12
          %p178 = scmp.lt.s32.totalorder %s177, 7
          %s179 = scalar_select %p178, %s177, 7
          %s180 = scalar_lea.vmem %s0, %s179
          %s181 = smul.u32 4, %s12
        $region36: #{ac_layer_forward.1} parent=31 // pred_fallthru
          _
      $region32: #{ac_layer_forward.1} parent=5 // pred_fallthru
        _
      %p182 = scmp.le.s32.totalorder 1, %s12
      %p183 = scmp.lt.s32.totalorder %s12, 3
      %p184 = pnand %p182, %p183
      %p185 = pneg %p184
      // Predicated region
      $region37: #{ac_layer_forward.1} parent=5 // pred_check
        _
      $region38: #{ac_layer_forward.1} parent=5 // pred_check_branch
        %187 = sbr.rel (%p184) target = $region40
      $region39: #{ac_layer_forward.1} parent=5 // pred_region
        %s188 = ssub.s32 %s12, 1
        %s189 = smul.u32 4, %s17
        %p190 = scmp.lt.s32.totalorder %s189, 7
        %s191 = scalar_select %p190, %s189, 7
        %s192 = scalar_lea.vmem %s0, %s191
        %p193 = pneg %p38
        %p194 = pneg %p35
        %p195 = pneg %p59
        %p196 = pneg %p56
        %p197 = pneg %p80
        %p198 = pneg %p77
        %p199 = pneg %p101
        %p200 = pneg %p98
        %p201 = pneg %p122
        %p202 = pneg %p119
        %p203 = pneg %p143
        %p204 = pneg %p140
        %s205 = smul.u32 4, %s17
        %p206 = scmp.lt.s32.totalorder %s205, 7
        %s207 = scalar_select %p206, %s205, 7
        %s208 = scalar_lea.vmem %s0, %s207
        %s209 = smul.u32 4, %s17
        %p210 = scmp.eq.s32.totalorder %s17, 0
        // Predicated region
        $region41: #{ac_layer_forward.1} parent=39 // pred_check
          %p211 = pneg %p210
        $region42: #{ac_layer_forward.1} parent=39 // pred_check_branch
          %213 = sbr.rel (%p211) target = $region44
        $region43: #{ac_layer_forward.1} parent=39 // pred_region
          %214 = vst [vmem:[#allocation2] sm:$0x3] 0.0
        $region44: #{ac_layer_forward.1} parent=39 // pred_fallthru
          _
        %v215 = vlaneseq
        %v216 = vshrl.u32 %v215, 7
        %v217 = vadd.s32 %v216, 8
        %v218 = vadd.s32 %v216, 16
        %v219 = vadd.s32 %v216, 24
        %v220 = vadd.s32 %v216, 32
        %v221 = vadd.s32 %v216, 40
        %v222 = vadd.s32 %v216, 48
        %v223 = vadd.s32 %v216, 56
        %v224 = vadd.s32 %v216, 64
        %v225 = vadd.s32 %v216, 72
        %v226 = vadd.s32 %v216, 80
        %v227 = vadd.s32 %v216, 88
        %v228 = vadd.s32 %v216, 96
        %v229 = vadd.s32 %v216, 104
        %v230 = vadd.s32 %v216, 112
        %v231 = vadd.s32 %v216, 120
        %v232 = vadd.s32 %v216, 128
        %v233 = vadd.s32 %v216, 136
        %v234 = vadd.s32 %v216, 144
        %v235 = vadd.s32 %v216, 152
        %v236 = vadd.s32 %v216, 160
        %v237 = vadd.s32 %v216, 168
        %v238 = vadd.s32 %v216, 176
        %v239 = vadd.s32 %v216, 184
        %v240 = vadd.s32 %v216, 192
        %v241 = vadd.s32 %v216, 200
        %v242 = vadd.s32 %v216, 208
        %v243 = vadd.s32 %v216, 216
        %v244 = vadd.s32 %v216, 224
        %v245 = vadd.s32 %v216, 232
        %v246 = vadd.s32 %v216, 240
        %v247 = vadd.s32 %v216, 248
        %v248 = vadd.s32 %v216, 256
        %v249 = vadd.s32 %v216, 264
        %v250 = vadd.s32 %v216, 272
        %v251 = vadd.s32 %v216, 280
        %v252 = vadd.s32 %v216, 288
        %v253 = vadd.s32 %v216, 296
        %v254 = vadd.s32 %v216, 304
        %v255 = vadd.s32 %v216, 312
        %v256 = vadd.s32 %v216, 320
        %v257 = vadd.s32 %v216, 328
        %v258 = vadd.s32 %v216, 336
        %v259 = vadd.s32 %v216, 344
        %v260 = vadd.s32 %v216, 352
        %v261 = vadd.s32 %v216, 360
        %v262 = vadd.s32 %v216, 368
        %v263 = vadd.s32 %v216, 376
        %v264 = vadd.s32 %v216, 384
        %v265 = vadd.s32 %v216, 392
        %v266 = vadd.s32 %v216, 400
        %v267 = vadd.s32 %v216, 408
        %v268 = vadd.s32 %v216, 416
        %v269 = vadd.s32 %v216, 424
        %v270 = vadd.s32 %v216, 432
        %v271 = vadd.s32 %v216, 440
        %v272 = vadd.s32 %v216, 448
        %v273 = vadd.s32 %v216, 456
        %v274 = vadd.s32 %v216, 464
        %v275 = vadd.s32 %v216, 472
        %v276 = vadd.s32 %v216, 480
        %v277 = vadd.s32 %v216, 488
        %v278 = vadd.s32 %v216, 496
        %v279 = vadd.s32 %v216, 504
        %s280 = smul.u32 %s17, 512
        %v281 = vstv %s280
        %v282 = vadd.s32 %v216, %v281
        %v283 = vadd.s32 %v217, %v281
        %v284 = vadd.s32 %v218, %v281
        %v285 = vadd.s32 %v219, %v281
        %v286 = vadd.s32 %v220, %v281
        %v287 = vadd.s32 %v221, %v281
        %v288 = vadd.s32 %v222, %v281
        %v289 = vadd.s32 %v223, %v281
        %v290 = vadd.s32 %v224, %v281
        %v291 = vadd.s32 %v225, %v281
        %v292 = vadd.s32 %v226, %v281
        %v293 = vadd.s32 %v227, %v281
        %v294 = vadd.s32 %v228, %v281
        %v295 = vadd.s32 %v229, %v281
        %v296 = vadd.s32 %v230, %v281
        %v297 = vadd.s32 %v231, %v281
        %v298 = vadd.s32 %v232, %v281
        %v299 = vadd.s32 %v233, %v281
        %v300 = vadd.s32 %v234, %v281
        %v301 = vadd.s32 %v235, %v281
        %v302 = vadd.s32 %v236, %v281
        %v303 = vadd.s32 %v237, %v281
        %v304 = vadd.s32 %v238, %v281
        %v305 = vadd.s32 %v239, %v281
        %v306 = vadd.s32 %v240, %v281
        %v307 = vadd.s32 %v241, %v281
        %v308 = vadd.s32 %v242, %v281
        %v309 = vadd.s32 %v243, %v281
        %v310 = vadd.s32 %v244, %v281
        %v311 = vadd.s32 %v245, %v281
        %v312 = vadd.s32 %v246, %v281
        %v313 = vadd.s32 %v247, %v281
        %v314 = vadd.s32 %v248, %v281
        %v315 = vadd.s32 %v249, %v281
        %v316 = vadd.s32 %v250, %v281
        %v317 = vadd.s32 %v251, %v281
        %v318 = vadd.s32 %v252, %v281
        %v319 = vadd.s32 %v253, %v281
        %v320 = vadd.s32 %v254, %v281
        %v321 = vadd.s32 %v255, %v281
        %v322 = vadd.s32 %v256, %v281
        %v323 = vadd.s32 %v257, %v281
        %v324 = vadd.s32 %v258, %v281
        %v325 = vadd.s32 %v259, %v281
        %v326 = vadd.s32 %v260, %v281
        %v327 = vadd.s32 %v261, %v281
        %v328 = vadd.s32 %v262, %v281
        %v329 = vadd.s32 %v263, %v281
        %v330 = vadd.s32 %v264, %v281
        %v331 = vadd.s32 %v265, %v281
        %v332 = vadd.s32 %v266, %v281
        %v333 = vadd.s32 %v267, %v281
        %v334 = vadd.s32 %v268, %v281
        %v335 = vadd.s32 %v269, %v281
        %v336 = vadd.s32 %v270, %v281
        %v337 = vadd.s32 %v271, %v281
        %v338 = vadd.s32 %v272, %v281
        %v339 = vadd.s32 %v273, %v281
        %v340 = vadd.s32 %v274, %v281
        %v341 = vadd.s32 %v275, %v281
        %v342 = vadd.s32 %v276, %v281
        %v343 = vadd.s32 %v277, %v281
        %v344 = vadd.s32 %v278, %v281
        %v345 = vadd.s32 %v279, %v281
        %v346 = vld [vmem:[%s1] sm:$0x1]
        %v347 = vld [vmem:[%s1 + $0x1] sm:$0x1]
        %v348 = vperm.slane %v346, 0
        %vm349 = vcmp.ge.s32.totalorder %v282, %v348
        %vm350 = vcmp.ge.s32.totalorder %v283, %v348
        %vm351 = vcmp.ge.s32.totalorder %v284, %v348
        %vm352 = vcmp.ge.s32.totalorder %v285, %v348
        %vm353 = vcmp.ge.s32.totalorder %v286, %v348
        %vm354 = vcmp.ge.s32.totalorder %v287, %v348
        %vm355 = vcmp.ge.s32.totalorder %v288, %v348
        %vm356 = vcmp.ge.s32.totalorder %v289, %v348
        %vm357 = vcmp.ge.s32.totalorder %v290, %v348
        %vm358 = vcmp.ge.s32.totalorder %v291, %v348
        %vm359 = vcmp.ge.s32.totalorder %v292, %v348
        %vm360 = vcmp.ge.s32.totalorder %v293, %v348
        %vm361 = vcmp.ge.s32.totalorder %v294, %v348
        %vm362 = vcmp.ge.s32.totalorder %v295, %v348
        %vm363 = vcmp.ge.s32.totalorder %v296, %v348
        %vm364 = vcmp.ge.s32.totalorder %v297, %v348
        %vm365 = vcmp.ge.s32.totalorder %v298, %v348
        %vm366 = vcmp.ge.s32.totalorder %v299, %v348
        %vm367 = vcmp.ge.s32.totalorder %v300, %v348
        %vm368 = vcmp.ge.s32.totalorder %v301, %v348
        %vm369 = vcmp.ge.s32.totalorder %v302, %v348
        %vm370 = vcmp.ge.s32.totalorder %v303, %v348
        %vm371 = vcmp.ge.s32.totalorder %v304, %v348
        %vm372 = vcmp.ge.s32.totalorder %v305, %v348
        %vm373 = vcmp.ge.s32.totalorder %v306, %v348
        %vm374 = vcmp.ge.s32.totalorder %v307, %v348
        %vm375 = vcmp.ge.s32.totalorder %v308, %v348
        %vm376 = vcmp.ge.s32.totalorder %v309, %v348
        %vm377 = vcmp.ge.s32.totalorder %v310, %v348
        %vm378 = vcmp.ge.s32.totalorder %v311, %v348
        %vm379 = vcmp.ge.s32.totalorder %v312, %v348
        %vm380 = vcmp.ge.s32.totalorder %v313, %v348
        %vm381 = vcmp.ge.s32.totalorder %v314, %v348
        %vm382 = vcmp.ge.s32.totalorder %v315, %v348
        %vm383 = vcmp.ge.s32.totalorder %v316, %v348
        %vm384 = vcmp.ge.s32.totalorder %v317, %v348
        %vm385 = vcmp.ge.s32.totalorder %v318, %v348
        %vm386 = vcmp.ge.s32.totalorder %v319, %v348
        %vm387 = vcmp.ge.s32.totalorder %v320, %v348
        %vm388 = vcmp.ge.s32.totalorder %v321, %v348
        %vm389 = vcmp.ge.s32.totalorder %v322, %v348
        %vm390 = vcmp.ge.s32.totalorder %v323, %v348
        %vm391 = vcmp.ge.s32.totalorder %v324, %v348
        %vm392 = vcmp.ge.s32.totalorder %v325, %v348
        %vm393 = vcmp.ge.s32.totalorder %v326, %v348
        %vm394 = vcmp.ge.s32.totalorder %v327, %v348
        %vm395 = vcmp.ge.s32.totalorder %v328, %v348
        %vm396 = vcmp.ge.s32.totalorder %v329, %v348
        %vm397 = vcmp.ge.s32.totalorder %v330, %v348
        %vm398 = vcmp.ge.s32.totalorder %v331, %v348
        %vm399 = vcmp.ge.s32.totalorder %v332, %v348
        %vm400 = vcmp.ge.s32.totalorder %v333, %v348
        %vm401 = vcmp.ge.s32.totalorder %v334, %v348
        %vm402 = vcmp.ge.s32.totalorder %v335, %v348
        %vm403 = vcmp.ge.s32.totalorder %v336, %v348
        %vm404 = vcmp.ge.s32.totalorder %v337, %v348
        %vm405 = vcmp.ge.s32.totalorder %v338, %v348
        %vm406 = vcmp.ge.s32.totalorder %v339, %v348
        %vm407 = vcmp.ge.s32.totalorder %v340, %v348
        %vm408 = vcmp.ge.s32.totalorder %v341, %v348
        %vm409 = vcmp.ge.s32.totalorder %v342, %v348
        %vm410 = vcmp.ge.s32.totalorder %v343, %v348
        %vm411 = vcmp.ge.s32.totalorder %v344, %v348
        %vm412 = vcmp.ge.s32.totalorder %v345, %v348
        %v413 = vperm.slane %v347, 0
        %vm414 = vcmp.lt.s32.totalorder %v282, %v413
        %vm415 = vcmp.lt.s32.totalorder %v283, %v413
        %vm416 = vcmp.lt.s32.totalorder %v284, %v413
        %vm417 = vcmp.lt.s32.totalorder %v285, %v413
        %vm418 = vcmp.lt.s32.totalorder %v286, %v413
        %vm419 = vcmp.lt.s32.totalorder %v287, %v413
        %vm420 = vcmp.lt.s32.totalorder %v288, %v413
        %vm421 = vcmp.lt.s32.totalorder %v289, %v413
        %vm422 = vcmp.lt.s32.totalorder %v290, %v413
        %vm423 = vcmp.lt.s32.totalorder %v291, %v413
        %vm424 = vcmp.lt.s32.totalorder %v292, %v413
        %vm425 = vcmp.lt.s32.totalorder %v293, %v413
        %vm426 = vcmp.lt.s32.totalorder %v294, %v413
        %vm427 = vcmp.lt.s32.totalorder %v295, %v413
        %vm428 = vcmp.lt.s32.totalorder %v296, %v413
        %vm429 = vcmp.lt.s32.totalorder %v297, %v413
        %vm430 = vcmp.lt.s32.totalorder %v298, %v413
        %vm431 = vcmp.lt.s32.totalorder %v299, %v413
        %vm432 = vcmp.lt.s32.totalorder %v300, %v413
        %vm433 = vcmp.lt.s32.totalorder %v301, %v413
        %vm434 = vcmp.lt.s32.totalorder %v302, %v413
        %vm435 = vcmp.lt.s32.totalorder %v303, %v413
        %vm436 = vcmp.lt.s32.totalorder %v304, %v413
        %vm437 = vcmp.lt.s32.totalorder %v305, %v413
        %vm438 = vcmp.lt.s32.totalorder %v306, %v413
        %vm439 = vcmp.lt.s32.totalorder %v307, %v413
        %vm440 = vcmp.lt.s32.totalorder %v308, %v413
        %vm441 = vcmp.lt.s32.totalorder %v309, %v413
        %vm442 = vcmp.lt.s32.totalorder %v310, %v413
        %vm443 = vcmp.lt.s32.totalorder %v311, %v413
        %vm444 = vcmp.lt.s32.totalorder %v312, %v413
        %vm445 = vcmp.lt.s32.totalorder %v313, %v413
        %vm446 = vcmp.lt.s32.totalorder %v314, %v413
        %vm447 = vcmp.lt.s32.totalorder %v315, %v413
        %vm448 = vcmp.lt.s32.totalorder %v316, %v413
        %vm449 = vcmp.lt.s32.totalorder %v317, %v413
        %vm450 = vcmp.lt.s32.totalorder %v318, %v413
        %vm451 = vcmp.lt.s32.totalorder %v319, %v413
        %vm452 = vcmp.lt.s32.totalorder %v320, %v413
        %vm453 = vcmp.lt.s32.totalorder %v321, %v413
        %vm454 = vcmp.lt.s32.totalorder %v322, %v413
        %vm455 = vcmp.lt.s32.totalorder %v323, %v413
        %vm456 = vcmp.lt.s32.totalorder %v324, %v413
        %vm457 = vcmp.lt.s32.totalorder %v325, %v413
        %vm458 = vcmp.lt.s32.totalorder %v326, %v413
        %vm459 = vcmp.lt.s32.totalorder %v327, %v413
        %vm460 = vcmp.lt.s32.totalorder %v328, %v413
        %vm461 = vcmp.lt.s32.totalorder %v329, %v413
        %vm462 = vcmp.lt.s32.totalorder %v330, %v413
        %vm463 = vcmp.lt.s32.totalorder %v331, %v413
        %vm464 = vcmp.lt.s32.totalorder %v332, %v413
        %vm465 = vcmp.lt.s32.totalorder %v333, %v413
        %vm466 = vcmp.lt.s32.totalorder %v334, %v413
        %vm467 = vcmp.lt.s32.totalorder %v335, %v413
        %vm468 = vcmp.lt.s32.totalorder %v336, %v413
        %vm469 = vcmp.lt.s32.totalorder %v337, %v413
        %vm470 = vcmp.lt.s32.totalorder %v338, %v413
        %vm471 = vcmp.lt.s32.totalorder %v339, %v413
        %vm472 = vcmp.lt.s32.totalorder %v340, %v413
        %vm473 = vcmp.lt.s32.totalorder %v341, %v413
        %vm474 = vcmp.lt.s32.totalorder %v342, %v413
        %vm475 = vcmp.lt.s32.totalorder %v343, %v413
        %vm476 = vcmp.lt.s32.totalorder %v344, %v413
        %vm477 = vcmp.lt.s32.totalorder %v345, %v413
        %vm478 = vmand %vm349, %vm414
        %vm479 = vmand %vm350, %vm415
        %vm480 = vmand %vm351, %vm416
        %vm481 = vmand %vm352, %vm417
        %vm482 = vmand %vm353, %vm418
        %vm483 = vmand %vm354, %vm419
        %vm484 = vmand %vm355, %vm420
        %vm485 = vmand %vm356, %vm421
        %vm486 = vmand %vm357, %vm422
        %vm487 = vmand %vm358, %vm423
        %vm488 = vmand %vm359, %vm424
        %vm489 = vmand %vm360, %vm425
        %vm490 = vmand %vm361, %vm426
        %vm491 = vmand %vm362, %vm427
        %vm492 = vmand %vm363, %vm428
        %vm493 = vmand %vm364, %vm429
        %vm494 = vmand %vm365, %vm430
        %vm495 = vmand %vm366, %vm431
        %vm496 = vmand %vm367, %vm432
        %vm497 = vmand %vm368, %vm433
        %vm498 = vmand %vm369, %vm434
        %vm499 = vmand %vm370, %vm435
        %vm500 = vmand %vm371, %vm436
        %vm501 = vmand %vm372, %vm437
        %vm502 = vmand %vm373, %vm438
        %vm503 = vmand %vm374, %vm439
        %vm504 = vmand %vm375, %vm440
        %vm505 = vmand %vm376, %vm441
        %vm506 = vmand %vm377, %vm442
        %vm507 = vmand %vm378, %vm443
        %vm508 = vmand %vm379, %vm444
        %vm509 = vmand %vm380, %vm445
        %vm510 = vmand %vm381, %vm446
        %vm511 = vmand %vm382, %vm447
        %vm512 = vmand %vm383, %vm448
        %vm513 = vmand %vm384, %vm449
        %vm514 = vmand %vm385, %vm450
        %vm515 = vmand %vm386, %vm451
        %vm516 = vmand %vm387, %vm452
        %vm517 = vmand %vm388, %vm453
        %vm518 = vmand %vm389, %vm454
        %vm519 = vmand %vm390, %vm455
        %vm520 = vmand %vm391, %vm456
        %vm521 = vmand %vm392, %vm457
        %vm522 = vmand %vm393, %vm458
        %vm523 = vmand %vm394, %vm459
        %vm524 = vmand %vm395, %vm460
        %vm525 = vmand %vm396, %vm461
        %vm526 = vmand %vm397, %vm462
        %vm527 = vmand %vm398, %vm463
        %vm528 = vmand %vm399, %vm464
        %vm529 = vmand %vm400, %vm465
        %vm530 = vmand %vm401, %vm466
        %vm531 = vmand %vm402, %vm467
        %vm532 = vmand %vm403, %vm468
        %vm533 = vmand %vm404, %vm469
        %vm534 = vmand %vm405, %vm470
        %vm535 = vmand %vm406, %vm471
        %vm536 = vmand %vm407, %vm472
        %vm537 = vmand %vm408, %vm473
        %vm538 = vmand %vm409, %vm474
        %vm539 = vmand %vm410, %vm475
        %vm540 = vmand %vm411, %vm476
        %vm541 = vmand %vm412, %vm477
        %v542 = vld [vmem:[%s2] sm:$0x1]
        %v544 = vperm.slane %v542, 0
        %v546 = vsel %vm478, %v544, 0.0
        %v547 = vsel %vm479, %v544, 0.0
        %v548 = vsel %vm480, %v544, 0.0
        %v549 = vsel %vm481, %v544, 0.0
        %v550 = vsel %vm482, %v544, 0.0
        %v551 = vsel %vm483, %v544, 0.0
        %v552 = vsel %vm484, %v544, 0.0
        %v553 = vsel %vm485, %v544, 0.0
        %v554 = vsel %vm486, %v544, 0.0
        %v555 = vsel %vm487, %v544, 0.0
        %v556 = vsel %vm488, %v544, 0.0
        %v557 = vsel %vm489, %v544, 0.0
        %v558 = vsel %vm490, %v544, 0.0
        %v559 = vsel %vm491, %v544, 0.0
        %v560 = vsel %vm492, %v544, 0.0
        %v561 = vsel %vm493, %v544, 0.0
        %v562 = vsel %vm494, %v544, 0.0
        %v563 = vsel %vm495, %v544, 0.0
        %v564 = vsel %vm496, %v544, 0.0
        %v565 = vsel %vm497, %v544, 0.0
        %v566 = vsel %vm498, %v544, 0.0
        %v567 = vsel %vm499, %v544, 0.0
        %v568 = vsel %vm500, %v544, 0.0
        %v569 = vsel %vm501, %v544, 0.0
        %v570 = vsel %vm502, %v544, 0.0
        %v571 = vsel %vm503, %v544, 0.0
        %v572 = vsel %vm504, %v544, 0.0
        %v573 = vsel %vm505, %v544, 0.0
        %v574 = vsel %vm506, %v544, 0.0
        %v575 = vsel %vm507, %v544, 0.0
        %v576 = vsel %vm508, %v544, 0.0
        %v577 = vsel %vm509, %v544, 0.0
        %v578 = vsel %vm510, %v544, 0.0
        %v579 = vsel %vm511, %v544, 0.0
        %v580 = vsel %vm512, %v544, 0.0
        %v581 = vsel %vm513, %v544, 0.0
        %v582 = vsel %vm514, %v544, 0.0
        %v583 = vsel %vm515, %v544, 0.0
        %v584 = vsel %vm516, %v544, 0.0
        %v585 = vsel %vm517, %v544, 0.0
        %v586 = vsel %vm518, %v544, 0.0
        %v587 = vsel %vm519, %v544, 0.0
        %v588 = vsel %vm520, %v544, 0.0
        %v589 = vsel %vm521, %v544, 0.0
        %v590 = vsel %vm522, %v544, 0.0
        %v591 = vsel %vm523, %v544, 0.0
        %v592 = vsel %vm524, %v544, 0.0
        %v593 = vsel %vm525, %v544, 0.0
        %v594 = vsel %vm526, %v544, 0.0
        %v595 = vsel %vm527, %v544, 0.0
        %v596 = vsel %vm528, %v544, 0.0
        %v597 = vsel %vm529, %v544, 0.0
        %v598 = vsel %vm530, %v544, 0.0
        %v599 = vsel %vm531, %v544, 0.0
        %v600 = vsel %vm532, %v544, 0.0
        %v601 = vsel %vm533, %v544, 0.0
        %v602 = vsel %vm534, %v544, 0.0
        %v603 = vsel %vm535, %v544, 0.0
        %v604 = vsel %vm536, %v544, 0.0
        %v605 = vsel %vm537, %v544, 0.0
        %v606 = vsel %vm538, %v544, 0.0
        %v607 = vsel %vm539, %v544, 0.0
        %v608 = vsel %vm540, %v544, 0.0
        %v609 = vsel %vm541, %v544, 0.0
        %v610 = vld [vmem:[#allocation2] sm:$0x3]
        %v611 = vld [vmem:[%s208] sm:$0xf]
        %v612 = vunpack.c.l.bf16 %v611
        %614 = vst [vmem:[#allocation1] ss:$4 sm:$0xff] %v612
        %v615 = vld.sshfl [vmem:[#allocation1] sm:$0xff pattern:$0x73625140]
        %v616 = vld.sshfl [vmem:[#allocation1 + $0x8] sm:$0xff pattern:$0x73625140]
        %v617 = vld.sshfl [vmem:[#allocation1 + $0x10] sm:$0xff pattern:$0x73625140]
        %v618 = vld.sshfl [vmem:[#allocation1 + $0x18] sm:$0xff pattern:$0x73625140]
        %623 = vmatpush.msra.mxu0 %v561
        %624 = vmatpush.msra.mxu0 %v560
        %625 = vmatpush.msra.mxu0 %v559
        %626 = vmatpush.msra.mxu0 %v558
        %627 = vmatpush.msra.mxu0 %v557
        %628 = vmatpush.msra.mxu0 %v556
        %629 = vmatpush.msra.mxu0 %v555
        %630 = vmatpush.msra.mxu0 %v554
        %631 = vmatpush.msra.mxu0 %v553
        %632 = vmatpush.msra.mxu0 %v552
        %633 = vmatpush.msra.mxu0 %v551
        %634 = vmatpush.msra.mxu0 %v550
        %635 = vmatpush.msra.mxu0 %v549
        %636 = vmatpush.msra.mxu0 %v548
        %637 = vmatpush.msra.mxu0 %v547
        %638 = vmatpush.msra.mxu0 %v546
        %639 = vmatmul.f32.gmra.mxu0 %v615
        %v640 = vpop.f32.mrf.mxu0
        %v641 = vadd.f32 0.0, %v640
        %642 = vdwg.mxu0
        %643 = vmatpush.msra.mxu0 %v577
        %644 = vmatpush.msra.mxu0 %v576
        %645 = vmatpush.msra.mxu0 %v575
        %646 = vmatpush.msra.mxu0 %v574
        %647 = vmatpush.msra.mxu0 %v573
        %648 = vmatpush.msra.mxu0 %v572
        %649 = vmatpush.msra.mxu0 %v571
        %650 = vmatpush.msra.mxu0 %v570
        %651 = vmatpush.msra.mxu0 %v569
        %652 = vmatpush.msra.mxu0 %v568
        %653 = vmatpush.msra.mxu0 %v567
        %654 = vmatpush.msra.mxu0 %v566
        %655 = vmatpush.msra.mxu0 %v565
        %656 = vmatpush.msra.mxu0 %v564
        %657 = vmatpush.msra.mxu0 %v563
        %658 = vmatpush.msra.mxu0 %v562
        %659 = vmatmul.f32.gmra.mxu0 %v616
        %v660 = vpop.f32.mrf.mxu0
        %v661 = vadd.f32 %v641, %v660
        %662 = vdwg.mxu0
        %663 = vmatpush.msra.mxu0 %v593
        %664 = vmatpush.msra.mxu0 %v592
        %665 = vmatpush.msra.mxu0 %v591
        %666 = vmatpush.msra.mxu0 %v590
        %667 = vmatpush.msra.mxu0 %v589
        %668 = vmatpush.msra.mxu0 %v588
        %669 = vmatpush.msra.mxu0 %v587
        %670 = vmatpush.msra.mxu0 %v586
        %671 = vmatpush.msra.mxu0 %v585
        %672 = vmatpush.msra.mxu0 %v584
        %673 = vmatpush.msra.mxu0 %v583
        %674 = vmatpush.msra.mxu0 %v582
        %675 = vmatpush.msra.mxu0 %v581
        %676 = vmatpush.msra.mxu0 %v580
        %677 = vmatpush.msra.mxu0 %v579
        %678 = vmatpush.msra.mxu0 %v578
        %679 = vmatmul.f32.gmra.mxu0 %v617
        %v680 = vpop.f32.mrf.mxu0
        %v681 = vadd.f32 %v661, %v680
        %682 = vdwg.mxu0
        %683 = vmatpush.msra.mxu0 %v609
        %684 = vmatpush.msra.mxu0 %v608
        %685 = vmatpush.msra.mxu0 %v607
        %686 = vmatpush.msra.mxu0 %v606
        %687 = vmatpush.msra.mxu0 %v605
        %688 = vmatpush.msra.mxu0 %v604
        %689 = vmatpush.msra.mxu0 %v603
        %690 = vmatpush.msra.mxu0 %v602
        %691 = vmatpush.msra.mxu0 %v601
        %692 = vmatpush.msra.mxu0 %v600
        %693 = vmatpush.msra.mxu0 %v599
        %694 = vmatpush.msra.mxu0 %v598
        %695 = vmatpush.msra.mxu0 %v597
        %696 = vmatpush.msra.mxu0 %v596
        %697 = vmatpush.msra.mxu0 %v595
        %698 = vmatpush.msra.mxu0 %v594
        %699 = vmatmul.f32.gmra.mxu0 %v618
        %v700 = vpop.f32.mrf.mxu0
        %v701 = vadd.f32 %v681, %v700
        %702 = vdwg.mxu0
        %v703 = vadd.f32 %v610, %v701
        %704 = vst [vmem:[#allocation2] sm:$0x3] %v703
        %p705 = scmp.eq.s32.totalorder %s17, 1
        // Predicated region
        $region45: #{ac_layer_forward.1} parent=39 // pred_check
          %p706 = pneg %p705
        $region46: #{ac_layer_forward.1} parent=39 // pred_check_branch
          %708 = sbr.rel (%p706) target = $region48
        $region47: #{ac_layer_forward.1} parent=39 // pred_region
          %v709 = vld [vmem:[#allocation2] sm:$0x3]
          %v710 = vld [vmem:[%s3] sm:$0xff]
          %v711 = vld [vmem:[%s3 + $0x8] sm:$0xff]
          %v712 = vld [vmem:[%s3 + $0x10] sm:$0xff]
          %v713 = vld [vmem:[%s3 + $0x18] sm:$0xff]
          %v714 = vld [vmem:[%s3 + $0x20] sm:$0xff]
          %v715 = vld [vmem:[%s3 + $0x28] sm:$0xff]
          %v716 = vld [vmem:[%s3 + $0x30] sm:$0xff]
          %v717 = vld [vmem:[%s3 + $0x38] sm:$0xff]
          %v718 = vld [vmem:[%s3 + $0x40] sm:$0xff]
          %v719 = vld [vmem:[%s3 + $0x48] sm:$0xff]
          %v720 = vld [vmem:[%s3 + $0x50] sm:$0xff]
          %v721 = vld [vmem:[%s3 + $0x58] sm:$0xff]
          %v722 = vld [vmem:[%s3 + $0x60] sm:$0xff]
          %v723 = vld [vmem:[%s3 + $0x68] sm:$0xff]
          %v724 = vld [vmem:[%s3 + $0x70] sm:$0xff]
          %v725 = vld [vmem:[%s3 + $0x78] sm:$0xff]
          %v726 = vld [vmem:[%s4] sm:$0x1]
          %v728 = vperm.slane %v726, 0
          %730 = vmatpush.msra.mxu0 %v725
          %731 = vmatpush.msra.mxu0 %v724
          %732 = vmatpush.msra.mxu0 %v723
          %733 = vmatpush.msra.mxu0 %v722
          %734 = vmatpush.msra.mxu0 %v721
          %735 = vmatpush.msra.mxu0 %v720
          %736 = vmatpush.msra.mxu0 %v719
          %737 = vmatpush.msra.mxu0 %v718
          %738 = vmatpush.msra.mxu0 %v717
          %739 = vmatpush.msra.mxu0 %v716
          %740 = vmatpush.msra.mxu0 %v715
          %741 = vmatpush.msra.mxu0 %v714
          %742 = vmatpush.msra.mxu0 %v713
          %743 = vmatpush.msra.mxu0 %v712
          %744 = vmatpush.msra.mxu0 %v711
          %745 = vmatpush.msra.mxu0 %v710
          %746 = vmatmul.f32.gmra.mxu0 %v709
          %v747 = vpop.f32.mrf.mxu0
          %v748 = vadd.f32 %v728, %v747
          %749 = vdwg.mxu0
          %750 = vst [vmem:[#allocation3] sm:$0x3] %v748
        $region48: #{ac_layer_forward.1} parent=39 // pred_fallthru
          _
        // Predicated region
        $region49: #{ac_layer_forward.1} parent=39 // pred_check
          %p751 = pneg %p140
        $region50: #{ac_layer_forward.1} parent=39 // pred_check_branch
          %753 = sbr.rel (%p751) target = $region52
        $region51: #{ac_layer_forward.1} parent=39 // pred_region
          %755 = vsyncadd [#allocation4], 0
          %s757 = sshll.u32 [#allocation3], 4
          %s758 = int_to_ptr.vmem [resolvable:$true] %s757
          %s759 = sshll.u32 %s5, 4
          %s760 = int_to_ptr.hbm [resolvable:$true] %s759
          %762 = dma.vmem_to_hbm [thread:$0]  %s758, 32, %s760, [#allocation4]
        $region52: #{ac_layer_forward.1} parent=39 // pred_fallthru
          _
        // Predicated region
        $region53: #{ac_layer_forward.1} parent=39 // pred_check
          %p763 = pneg %p140
        $region54: #{ac_layer_forward.1} parent=39 // pred_check_branch
          %765 = sbr.rel (%p763) target = $region56
        $region55: #{ac_layer_forward.1} parent=39 // pred_region
          %767 = dma.done [#allocation4], 32
        $region56: #{ac_layer_forward.1} parent=39 // pred_fallthru
          _
      $region40: #{ac_layer_forward.1} parent=5 // pred_fallthru
        _
      %p768 = scmp.le.s32.totalorder 2, %s12
      // Predicated region
      $region57: #{ac_layer_forward.1} parent=5 // pred_check
        %p769 = pneg %p768
      $region58: #{ac_layer_forward.1} parent=5 // pred_check_branch
        %771 = sbr.rel (%p769) target = $region60
      $region59: #{ac_layer_forward.1} parent=5 // pred_region
        %s772 = ssub.s32 %s12, 2
      $region60: #{ac_layer_forward.1} parent=5 // pred_fallthru
        _
    $region6: #{ac_layer_forward.1} parent=1 // loop_footer
      %s16 = sadd.s32 1, %s12
    $region7: #{ac_layer_forward.1} parent=1 // loop_footer_branch
      %11 = sbr.rel target = $region3
    $region8: #{ac_layer_forward.1} parent=1 // loop_exit
      _
    %773 = vsyncpa [#allocation4], 1
    %s774 = scalar_lea.sflag [#allocation4], 1
    %775 = vsyncpa %s774, 1

</llo_original>
